<compile_context>
chip_gen: v5e
topology: v5e:2x2
jax: 0.10.0
libtpu: 0.0.40
codegen_flags: <defaults>
</compile_context>

<pallas_src>
import functools

import jax
import jax.numpy as jnp
from jax.experimental import pallas as pl
from jax.experimental.pallas import tpu as pltpu

LN_EPS = 1e-5
HEAD_PAD = 128  # lane-dense fused head width (mean | log_std | zero padding)


def _round_up(x, m):
    return ((x + m - 1) // m) * m


def _cdiv(a, b):
    return (a + b - 1) // b


def _layernorm(x, gamma, beta):
    # LayerNorm over last axis, matching torch.nn.LayerNorm(hidden_dim).
    mean = jnp.mean(x, axis=-1, keepdims=True)
    var = jnp.mean(jnp.square(x - mean), axis=-1, keepdims=True)
    inv = jax.lax.rsqrt(var + LN_EPS)
    return (x - mean) * inv * gamma + beta


def actor_kernel(state_ref, w1_ref, wstack_ref, head_ref, vec_ref, out_ref,
                 *, hidden, output_dim):
    # state_ref : (TILE_B, in_dim)    input states (native feature width)
    # w1_ref    : (in_dim, H)         fc1 weight (resident)
    # wstack_ref: (2, H, H)           [w2, w3] (resident)
    # head_ref  : (H + 8, HEAD_PAD)   rows [0:H) = fused head W, row H = fused bias
    # vec_ref   : (8, H)              rows: b1,b2,b3,ln1_g,ln1_b,ln2_g,ln2_b,pad
    # out_ref   : (TILE_B, HEAD_PAD)  cols [0:out) = mean, [out:2out) = std
    x = state_ref[...]

    b1 = vec_ref[0:1, :]
    b2 = vec_ref[1:2, :]
    b3 = vec_ref[2:3, :]
    g1 = vec_ref[3:4, :]
    be1 = vec_ref[4:5, :]
    g2 = vec_ref[5:6, :]
    be2 = vec_ref[6:7, :]

    # fc1 -> LayerNorm1 -> ReLU
    h = jnp.dot(x, w1_ref[...], preferred_element_type=jnp.float32) + b1
    h = jnp.maximum(_layernorm(h, g1, be1), 0.0)

    # fc2 -> LayerNorm2 -> ReLU
    h = jnp.dot(h, wstack_ref[0], preferred_element_type=jnp.float32) + b2
    h = jnp.maximum(_layernorm(h, g2, be2), 0.0)

    # fc3 -> ReLU -> dropout (eval == identity)
    h = jnp.dot(h, wstack_ref[1], preferred_element_type=jnp.float32) + b3
    h = jnp.maximum(h, 0.0)

    # Fused heads: one MXU push, one lane-dense (128-wide) store.
    wh = head_ref[0:hidden, :]
    bh = head_ref[hidden:hidden + 1, :]
    z = jnp.dot(h, wh, preferred_element_type=jnp.float32) + bh  # (TILE_B, HEAD_PAD)

    # Single exp + single approx reciprocal over the whole slab:
    #   mean lanes: sigmoid(z) = 1 / (1 + exp(-z))
    #   std  lanes: exp(clip(z, -20, 20))
    col = jax.lax.broadcasted_iota(jnp.int32, z.shape, dimension=1)
    is_mean = col < output_dim
    arg = jnp.where(is_mean, -z, jnp.clip(z, -20.0, 20.0))
    e = jnp.exp(arg)
    mean_vals = pl.reciprocal(1.0 + e, approx=True)
    out_ref[...] = jnp.where(is_mean, mean_vals, e)


@functools.partial(jax.jit, static_argnames=("output_dim", "tile_b_max"))
def actor_forward(state, packed, output_dim, tile_b_max=2048):
    """state: [B, input_dim] float32. Returns (mean, std), each [B, output_dim]."""
    w1 = packed["w1"]               # (in_dim, H)
    w_stack = packed["w_stack"]     # (2, H, H)
    head = packed["head"]           # (H + 8, HEAD_PAD)
    vecs = packed["vecs"]           # (8, H)
    hidden = w_stack.shape[-1]
    in_dim = w1.shape[0]
    head_rows = head.shape[0]
    head_pad = head.shape[-1]

    batch = state.shape[0]
    assert state.shape[1] == in_dim

    # --- Tile selection (balanced tiles; >=2 even grid steps for v7x at large batch).
    tile_cap = max(8, _round_up(tile_b_max, 8))
    num_tiles = max(1, _cdiv(batch, tile_cap))
    if batch >= 512:
        num_tiles = max(num_tiles, 2)
        num_tiles += num_tiles % 2          # even step count -> both v7x TCs busy
    tile_b = _round_up(_cdiv(batch, num_tiles), 8)
    b_pad = tile_b * num_tiles
    grid = (num_tiles,)

    # Minimal batch-row padding only (feature width stays native: no (b_pad, H)
    # materialization / extra HBM traffic).
    state = state.astype(jnp.float32)
    if b_pad != batch:
        state = jnp.pad(state, ((0, b_pad - batch), (0, 0)))

    kernel = functools.partial(actor_kernel, hidden=hidden, output_dim=output_dim)

    out = pl.pallas_call(
        kernel,
        out_shape=jax.ShapeDtypeStruct((b_pad, head_pad), jnp.float32),
        grid=grid,
        in_specs=[
            pl.BlockSpec((tile_b, in_dim), lambda i: (i, 0)),
            pl.BlockSpec((in_dim, hidden), lambda i: (0, 0)),
            pl.BlockSpec((2, hidden, hidden), lambda i: (0, 0, 0)),
            pl.BlockSpec((head_rows, head_pad), lambda i: (0, 0)),
            pl.BlockSpec((8, hidden), lambda i: (0, 0)),
        ],
        out_specs=pl.BlockSpec((tile_b, head_pad), lambda i: (i, 0)),
        compiler_params=pltpu.CompilerParams(
            dimension_semantics=("parallel",)),
    )(state, w1, w_stack, head, vecs)

    mean = out[:batch, :output_dim]
    std = out[:batch, output_dim:2 * output_dim]
    return mean, std


def init_params(key, input_dim, output_dim, hidden_dim=64):
    """Deterministic synthetic parameters. Linear weights stored as (in, out)."""
    ks = jax.random.split(key, 10)

    def linear(kw, kb, fan_in, fan_out):
        bound = 1.0 / jnp.sqrt(jnp.float32(fan_in))
        w = jax.random.uniform(kw, (fan_in, fan_out), jnp.float32, -bound, bound)
        b = jax.random.uniform(kb, (fan_out,), jnp.float32, -bound, bound)
        return w, b.reshape(1, fan_out)

    w1, b1 = linear(ks[0], ks[1], input_dim, hidden_dim)
    w2, b2 = linear(ks[2], ks[3], hidden_dim, hidden_dim)
    w3, b3 = linear(ks[4], ks[5], hidden_dim, hidden_dim)
    wm, bm = linear(ks[6], ks[7], hidden_dim, output_dim)
    ws, bs = linear(ks[8], ks[9], hidden_dim, output_dim)

    return {
        "w1": w1, "b1": b1,
        "w2": w2, "b2": b2,
        "w3": w3, "b3": b3,
        "wm": wm, "bm": bm,
        "ws": ws, "bs": bs,
        "ln1_g": jnp.ones((1, hidden_dim), jnp.float32),
        "ln1_b": jnp.zeros((1, hidden_dim), jnp.float32),
        "ln2_g": jnp.ones((1, hidden_dim), jnp.float32),
        "ln2_b": jnp.zeros((1, hidden_dim), jnp.float32),
    }


def pack_params(params, input_dim, hidden_dim, output_dim):
    """Pack the 15 raw tensors into 4 contiguous, resident kernel inputs."""
    H = hidden_dim
    assert 2 * output_dim <= HEAD_PAD

    # fc1 weight kept at its native (in_dim, H) shape (block == full array dims).
    w1 = params["w1"].astype(jnp.float32)

    # Stack of the two hidden-size weights.
    w_stack = jnp.stack([params["w2"], params["w3"]], axis=0).astype(jnp.float32)

    # Fused head: columns [0:out) = mean weights, [out:2*out) = log_std weights,
    # rest zero so the kernel output is a full 128-lane slab.
    wh = jnp.zeros((H, HEAD_PAD), jnp.float32)
    wh = wh.at[:, :output_dim].set(params["wm"])
    wh = wh.at[:, output_dim:2 * output_dim].set(params["ws"])
    bh = jnp.zeros((1, HEAD_PAD), jnp.float32)
    bh = bh.at[:, :output_dim].set(params["bm"])
    bh = bh.at[:, output_dim:2 * output_dim].set(params["bs"])
    head = jnp.zeros((H + 8, HEAD_PAD), jnp.float32)
    head = head.at[:H, :].set(wh)
    head = head.at[H:H + 1, :].set(bh)

    # Bias / LayerNorm vector slab (8 sublanes, last row is padding).
    vecs = jnp.zeros((8, H), jnp.float32)
    vecs = vecs.at[0].set(params["b1"].reshape(H))
    vecs = vecs.at[1].set(params["b2"].reshape(H))
    vecs = vecs.at[2].set(params["b3"].reshape(H))
    vecs = vecs.at[3].set(params["ln1_g"].reshape(H))
    vecs = vecs.at[4].set(params["ln1_b"].reshape(H))
    vecs = vecs.at[5].set(params["ln2_g"].reshape(H))
    vecs = vecs.at[6].set(params["ln2_b"].reshape(H))

    return {"w1": w1, "w_stack": w_stack, "head": head, "vecs": vecs}


def reference_forward(state, params):
    """Pure-JAX reference mirroring the PyTorch module (eval mode)."""
    def ln(x, g, b):
        mu = jnp.mean(x, axis=-1, keepdims=True)
        var = jnp.mean(jnp.square(x - mu), axis=-1, keepdims=True)
        return (x - mu) * jax.lax.rsqrt(var + LN_EPS) * g + b

    h = jnp.maximum(ln(state @ params["w1"] + params["b1"],
                       params["ln1_g"], params["ln1_b"]), 0.0)
    h = jnp.maximum(ln(h @ params["w2"] + params["b2"],
                       params["ln2_g"], params["ln2_b"]), 0.0)
    h = jnp.maximum(h @ params["w3"] + params["b3"], 0.0)
    mean = jax.nn.sigmoid(h @ params["wm"] + params["bm"])
    std = jnp.exp(jnp.clip(h @ params["ws"] + params["bs"], -20.0, 20.0))
    return mean, std


def _check(mean, std, ref_mean, ref_std):
    # mean uses an approx EUP reciprocal (pl.reciprocal(approx=True)) for
    # sigmoid, so allow ~1e-3 absolute slack; std path is exact f32 exp.
    assert jnp.allclose(mean, ref_mean, atol=5e-3, rtol=5e-3)
    assert jnp.allclose(std, ref_std, atol=1e-4, rtol=1e-4)


if __name__ == "__main__":
    key = jax.random.PRNGKey(0)
    k_state, k_params, k_state2, k_state3 = jax.random.split(key, 4)

    batch = 8
    input_dim = 16
    output_dim = 4
    hidden_dim = 64

    state = jax.random.normal(k_state, (batch, input_dim), jnp.float32)
    params = init_params(k_params, input_dim, output_dim, hidden_dim)
    packed = pack_params(params, input_dim, hidden_dim, output_dim)

    mean, std = actor_forward(state, packed, output_dim)
    jax.block_until_ready((mean, std))
    assert mean.shape == (batch, output_dim) and std.shape == (batch, output_dim)
    _check(mean, std, *reference_forward(state, params))

    # Batch not a multiple of the tile -> exercises batch-row padding and a
    # multi-step "parallel" grid (TILE_B=8, grid=(3,)).
    state2 = jax.random.normal(k_state2, (20, input_dim), jnp.float32)
    mean2, std2 = actor_forward(state2, packed, output_dim, tile_b_max=8)
    jax.block_until_ready((mean2, std2))
    _check(mean2, std2, *reference_forward(state2, params))

    # batch >= 512 -> forced even >=2-step grid (v7x dual-TC path), balanced
    # tiles (2 x 304 for batch=600) with only 8 padded rows.
    state3 = jax.random.normal(k_state3, (600, input_dim), jnp.float32)
    mean3, std3 = actor_forward(state3, packed, output_dim)
    jax.block_until_ready((mean3, std3))
    _check(mean3, std3, *reference_forward(state3, params))

    print("KERNEL_OK")
</pallas_src>

<mosaic_0001>
module attributes {stable_mosaic.version = 11 : i64} {
  func.func @actor_kernel(%arg0: i32, %arg1: memref<8x16xf32, #tpu.memory_space<vmem>>, %arg2: memref<16x64xf32, #tpu.memory_space<vmem>>, %arg3: memref<2x64x64xf32, #tpu.memory_space<vmem>>, %arg4: memref<72x128xf32, #tpu.memory_space<vmem>>, %arg5: memref<8x64xf32, #tpu.memory_space<vmem>>, %arg6: memref<8x128xf32, #tpu.memory_space<vmem>>) attributes {dimension_semantics = [#tpu.dimension_semantics<parallel>], iteration_bounds = array<i64: 1>, scalar_prefetch = 0 : i64, scratch_operands = 0 : i64, tpu.core_type = #tpu.core_type<tc>, window_params = [{transform_indices = @transform_0, window_bounds = array<i64: 8, 16>}, {pipeline_mode = #tpu.pipeline_mode<synchronous>, transform_indices = @transform_1, window_bounds = array<i64: 16, 64>}, {pipeline_mode = #tpu.pipeline_mode<synchronous>, transform_indices = @transform_2, window_bounds = array<i64: 2, 64, 64>}, {pipeline_mode = #tpu.pipeline_mode<synchronous>, transform_indices = @transform_3, window_bounds = array<i64: 72, 128>}, {pipeline_mode = #tpu.pipeline_mode<synchronous>, transform_indices = @transform_4, window_bounds = array<i64: 8, 64>}, {transform_indices = @transform_5, window_bounds = array<i64: 8, 128>}]} {
    %c0 = arith.constant 0 : index
    %c0_0 = arith.constant 0 : index
    %0 = vector.load %arg1[%c0, %c0_0] : memref<8x16xf32, #tpu.memory_space<vmem>>, vector<8x16xf32>
    %c0_1 = arith.constant 0 : index
    %c0_2 = arith.constant 0 : index
    %1 = vector.load %arg5[%c0_1, %c0_2] : memref<8x64xf32, #tpu.memory_space<vmem>>, vector<1x64xf32>
    %c1 = arith.constant 1 : index
    %c0_3 = arith.constant 0 : index
    %2 = vector.load %arg5[%c1, %c0_3] : memref<8x64xf32, #tpu.memory_space<vmem>>, vector<1x64xf32>
    %c2 = arith.constant 2 : index
    %c0_4 = arith.constant 0 : index
    %3 = vector.load %arg5[%c2, %c0_4] : memref<8x64xf32, #tpu.memory_space<vmem>>, vector<1x64xf32>
    %c3 = arith.constant 3 : index
    %c0_5 = arith.constant 0 : index
    %4 = vector.load %arg5[%c3, %c0_5] : memref<8x64xf32, #tpu.memory_space<vmem>>, vector<1x64xf32>
    %c4 = arith.constant 4 : index
    %c0_6 = arith.constant 0 : index
    %5 = vector.load %arg5[%c4, %c0_6] : memref<8x64xf32, #tpu.memory_space<vmem>>, vector<1x64xf32>
    %c5 = arith.constant 5 : index
    %c0_7 = arith.constant 0 : index
    %6 = vector.load %arg5[%c5, %c0_7] : memref<8x64xf32, #tpu.memory_space<vmem>>, vector<1x64xf32>
    %c6 = arith.constant 6 : index
    %c0_8 = arith.constant 0 : index
    %7 = vector.load %arg5[%c6, %c0_8] : memref<8x64xf32, #tpu.memory_space<vmem>>, vector<1x64xf32>
    %c0_9 = arith.constant 0 : index
    %c0_10 = arith.constant 0 : index
    %8 = vector.load %arg2[%c0_9, %c0_10] : memref<16x64xf32, #tpu.memory_space<vmem>>, vector<16x64xf32>
    %cst = arith.constant dense<0.000000e+00> : vector<8x64xf32>
    %9 = tpu.matmul %0, %8, %cst {dimension_numbers = #tpu.dot_dimension_numbers<[1], [0], [0], [1], [0, 0, 1, 1], [], []>} : vector<8x16xf32>, vector<16x64xf32>, vector<8x64xf32> -> vector<8x64xf32>
    %10 = vector.broadcast %1 : vector<1x64xf32> to vector<8x64xf32>
    %11 = arith.addf %9, %10 : vector<8x64xf32>
    %cst_11 = arith.constant dense<0.000000e+00> : vector<8xf32>
    %12 = vector.multi_reduction <add>, %11, %cst_11 [1] : vector<8x64xf32> to vector<8xf32>
    %13 = vector.shape_cast %12 : vector<8xf32> to vector<8x1xf32>
    %cst_12 = arith.constant 6.400000e+01 : f32
    %14 = vector.broadcast %cst_12 : f32 to vector<8x1xf32>
    %15 = arith.divf %13, %14 : vector<8x1xf32>
    %16 = vector.broadcast %15 : vector<8x1xf32> to vector<8x64xf32>
    %17 = arith.subf %11, %16 : vector<8x64xf32>
    %18 = arith.mulf %17, %17 : vector<8x64xf32>
    %cst_13 = arith.constant dense<0.000000e+00> : vector<8xf32>
    %19 = vector.multi_reduction <add>, %18, %cst_13 [1] : vector<8x64xf32> to vector<8xf32>
    %20 = vector.shape_cast %19 : vector<8xf32> to vector<8x1xf32>
    %cst_14 = arith.constant 6.400000e+01 : f32
    %21 = vector.broadcast %cst_14 : f32 to vector<8x1xf32>
    %22 = arith.divf %20, %21 : vector<8x1xf32>
    %cst_15 = arith.constant 9.99999974E-6 : f32
    %23 = vector.broadcast %cst_15 : f32 to vector<8x1xf32>
    %24 = arith.addf %22, %23 : vector<8x1xf32>
    %25 = math.rsqrt %24 : vector<8x1xf32>
    %26 = vector.broadcast %15 : vector<8x1xf32> to vector<8x64xf32>
    %27 = arith.subf %11, %26 : vector<8x64xf32>
    %28 = vector.broadcast %25 : vector<8x1xf32> to vector<8x64xf32>
    %29 = arith.mulf %27, %28 : vector<8x64xf32>
    %30 = vector.broadcast %4 : vector<1x64xf32> to vector<8x64xf32>
    %31 = arith.mulf %29, %30 : vector<8x64xf32>
    %32 = vector.broadcast %5 : vector<1x64xf32> to vector<8x64xf32>
    %33 = arith.addf %31, %32 : vector<8x64xf32>
    %cst_16 = arith.constant 0.000000e+00 : f32
    %34 = vector.broadcast %cst_16 : f32 to vector<8x64xf32>
    %35 = arith.maximumf %33, %34 : vector<8x64xf32>
    %c0_17 = arith.constant 0 : index
    %c0_18 = arith.constant 0 : index
    %c0_19 = arith.constant 0 : index
    %36 = vector.load %arg3[%c0_17, %c0_18, %c0_19] : memref<2x64x64xf32, #tpu.memory_space<vmem>>, vector<1x64x64xf32>
    %37 = vector.shape_cast %36 : vector<1x64x64xf32> to vector<64x64xf32>
    %cst_20 = arith.constant dense<0.000000e+00> : vector<8x64xf32>
    %38 = tpu.matmul %35, %37, %cst_20 {dimension_numbers = #tpu.dot_dimension_numbers<[1], [0], [0], [1], [0, 0, 1, 1], [], []>} : vector<8x64xf32>, vector<64x64xf32>, vector<8x64xf32> -> vector<8x64xf32>
    %39 = vector.broadcast %2 : vector<1x64xf32> to vector<8x64xf32>
    %40 = arith.addf %38, %39 : vector<8x64xf32>
    %cst_21 = arith.constant dense<0.000000e+00> : vector<8xf32>
    %41 = vector.multi_reduction <add>, %40, %cst_21 [1] : vector<8x64xf32> to vector<8xf32>
    %42 = vector.shape_cast %41 : vector<8xf32> to vector<8x1xf32>
    %cst_22 = arith.constant 6.400000e+01 : f32
    %43 = vector.broadcast %cst_22 : f32 to vector<8x1xf32>
    %44 = arith.divf %42, %43 : vector<8x1xf32>
    %45 = vector.broadcast %44 : vector<8x1xf32> to vector<8x64xf32>
    %46 = arith.subf %40, %45 : vector<8x64xf32>
    %47 = arith.mulf %46, %46 : vector<8x64xf32>
    %cst_23 = arith.constant dense<0.000000e+00> : vector<8xf32>
    %48 = vector.multi_reduction <add>, %47, %cst_23 [1] : vector<8x64xf32> to vector<8xf32>
    %49 = vector.shape_cast %48 : vector<8xf32> to vector<8x1xf32>
    %cst_24 = arith.constant 6.400000e+01 : f32
    %50 = vector.broadcast %cst_24 : f32 to vector<8x1xf32>
    %51 = arith.divf %49, %50 : vector<8x1xf32>
    %cst_25 = arith.constant 9.99999974E-6 : f32
    %52 = vector.broadcast %cst_25 : f32 to vector<8x1xf32>
    %53 = arith.addf %51, %52 : vector<8x1xf32>
    %54 = math.rsqrt %53 : vector<8x1xf32>
    %55 = vector.broadcast %44 : vector<8x1xf32> to vector<8x64xf32>
    %56 = arith.subf %40, %55 : vector<8x64xf32>
    %57 = vector.broadcast %54 : vector<8x1xf32> to vector<8x64xf32>
    %58 = arith.mulf %56, %57 : vector<8x64xf32>
    %59 = vector.broadcast %6 : vector<1x64xf32> to vector<8x64xf32>
    %60 = arith.mulf %58, %59 : vector<8x64xf32>
    %61 = vector.broadcast %7 : vector<1x64xf32> to vector<8x64xf32>
    %62 = arith.addf %60, %61 : vector<8x64xf32>
    %cst_26 = arith.constant 0.000000e+00 : f32
    %63 = vector.broadcast %cst_26 : f32 to vector<8x64xf32>
    %64 = arith.maximumf %62, %63 : vector<8x64xf32>
    %c1_27 = arith.constant 1 : index
    %c0_28 = arith.constant 0 : index
    %c0_29 = arith.constant 0 : index
    %65 = vector.load %arg3[%c1_27, %c0_28, %c0_29] : memref<2x64x64xf32, #tpu.memory_space<vmem>>, vector<1x64x64xf32>
    %66 = vector.shape_cast %65 : vector<1x64x64xf32> to vector<64x64xf32>
    %cst_30 = arith.constant dense<0.000000e+00> : vector<8x64xf32>
    %67 = tpu.matmul %64, %66, %cst_30 {dimension_numbers = #tpu.dot_dimension_numbers<[1], [0], [0], [1], [0, 0, 1, 1], [], []>} : vector<8x64xf32>, vector<64x64xf32>, vector<8x64xf32> -> vector<8x64xf32>
    %68 = vector.broadcast %3 : vector<1x64xf32> to vector<8x64xf32>
    %69 = arith.addf %67, %68 : vector<8x64xf32>
    %cst_31 = arith.constant 0.000000e+00 : f32
    %70 = vector.broadcast %cst_31 : f32 to vector<8x64xf32>
    %71 = arith.maximumf %69, %70 : vector<8x64xf32>
    %c0_32 = arith.constant 0 : index
    %c0_33 = arith.constant 0 : index
    %72 = vector.load %arg4[%c0_32, %c0_33] : memref<72x128xf32, #tpu.memory_space<vmem>>, vector<64x128xf32>
    %c64 = arith.constant 64 : index
    %c0_34 = arith.constant 0 : index
    %73 = vector.load %arg4[%c64, %c0_34] : memref<72x128xf32, #tpu.memory_space<vmem>>, vector<1x128xf32>
    %cst_35 = arith.constant dense<0.000000e+00> : vector<8x128xf32>
    %74 = tpu.matmul %71, %72, %cst_35 {dimension_numbers = #tpu.dot_dimension_numbers<[1], [0], [0], [1], [0, 0, 1, 1], [], []>} : vector<8x64xf32>, vector<64x128xf32>, vector<8x128xf32> -> vector<8x128xf32>
    %75 = vector.broadcast %73 : vector<1x128xf32> to vector<8x128xf32>
    %76 = arith.addf %74, %75 : vector<8x128xf32>
    %77 = tpu.iota {dimensions = array<i32: 1>} : vector<8x128xi32>
    %c4_i32 = arith.constant 4 : i32
    %78 = vector.broadcast %c4_i32 : i32 to vector<8x128xi32>
    %79 = arith.cmpi slt, %77, %78 : vector<8x128xi32>
    %cst_36 = arith.constant 0.000000e+00 : f32
    %80 = vector.broadcast %cst_36 : f32 to vector<8x128xf32>
    %81 = arith.subf %80, %76 : vector<8x128xf32>
    %cst_37 = arith.constant -2.000000e+01 : f32
    %cst_38 = arith.constant 2.000000e+01 : f32
    %82 = vector.broadcast %cst_37 : f32 to vector<8x128xf32>
    %83 = arith.maximumf %82, %76 : vector<8x128xf32>
    %84 = vector.broadcast %cst_38 : f32 to vector<8x128xf32>
    %85 = arith.minimumf %84, %83 : vector<8x128xf32>
    %86 = arith.select %79, %81, %85 : vector<8x128xi1>, vector<8x128xf32>
    %87 = math.exp %86 : vector<8x128xf32>
    %cst_39 = arith.constant 1.000000e+00 : f32
    %88 = vector.broadcast %cst_39 : f32 to vector<8x128xf32>
    %89 = arith.addf %88, %87 : vector<8x128xf32>
    %90 = tpu.reciprocal %89 {approx = true} : vector<8x128xf32> -> vector<8x128xf32>
    %91 = arith.select %79, %90, %87 : vector<8x128xi1>, vector<8x128xf32>
    %c0_40 = arith.constant 0 : index
    %c0_41 = arith.constant 0 : index
    %92 = vector.load %arg6[%c0_40, %c0_41] : memref<8x128xf32, #tpu.memory_space<vmem>>, vector<8x128xf32>
    tpu.vector_store %arg6[%c0_40, %c0_41], %91 {strides = array<i32>} : memref<8x128xf32, #tpu.memory_space<vmem>>, vector<8x128xf32>,
    return
  }
  func.func @transform_0(%arg0: i32) -> (i32, i32) {
    %c0_i32 = arith.constant 0 : i32
    %c0_i32_0 = arith.constant 0 : i32
    return %arg0, %c0_i32 : i32, i32
  }
  func.func @transform_1(%arg0: i32) -> (i32, i32) {
    %c0_i32 = arith.constant 0 : i32
    %c0_i32_0 = arith.constant 0 : i32
    %c0_i32_1 = arith.constant 0 : i32
    return %c0_i32, %c0_i32_0 : i32, i32
  }
  func.func @transform_2(%arg0: i32) -> (i32, i32, i32) {
    %c0_i32 = arith.constant 0 : i32
    %c0_i32_0 = arith.constant 0 : i32
    %c0_i32_1 = arith.constant 0 : i32
    %c0_i32_2 = arith.constant 0 : i32
    return %c0_i32, %c0_i32_0, %c0_i32_1 : i32, i32, i32
  }
  func.func @transform_3(%arg0: i32) -> (i32, i32) {
    %c0_i32 = arith.constant 0 : i32
    %c0_i32_0 = arith.constant 0 : i32
    %c0_i32_1 = arith.constant 0 : i32
    return %c0_i32, %c0_i32_0 : i32, i32
  }
  func.func @transform_4(%arg0: i32) -> (i32, i32) {
    %c0_i32 = arith.constant 0 : i32
    %c0_i32_0 = arith.constant 0 : i32
    %c0_i32_1 = arith.constant 0 : i32
    return %c0_i32, %c0_i32_0 : i32, i32
  }
  func.func @transform_5(%arg0: i32) -> (i32, i32) {
    %c0_i32 = arith.constant 0 : i32
    %c0_i32_0 = arith.constant 0 : i32
    return %arg0, %c0_i32 : i32, i32
  }
}

</mosaic_0001>

<llo_original>
// kernel: actor_forward.1
$region0: #{actor_forward.1}
  #allocation0 [shape = 'u32[]', space=smem, size = 0x4, offset = 0x4, fixed_abs, tag = 'smem constant byte address 0x4 - core index']
  #allocation1 [shape = 'u32[72,128]{1,0:T(1,128)}', space=vmem, size = 0x9000, scoped, tag = 'internal scratch']
  %s0 = inlined_call_operand.hbm [shape: f32[8,16], index: 0, kind: input, shape index: {}]
  %s1 = inlined_call_operand.hbm [shape: f32[16,64], index: 1, kind: input, shape index: {}]
  %s2 = inlined_call_operand.hbm [shape: f32[2,64,64], index: 2, kind: input, shape index: {}]
  %s3 = inlined_call_operand.hbm [shape: f32[72,128], index: 3, kind: input, shape index: {}]
  %s4 = inlined_call_operand.hbm [shape: f32[8,64], index: 4, kind: input, shape index: {}]
  %s5 = inlined_call_operand.vmem [shape: f32[8,128], index: 5, kind: output, shape index: {}]
  %s6 = sld [smem:[#allocation0]]
  $region50: #{actor_forward.1} parent=0
    _
  %s8 = ssub.s32 1, %s6
  %s9 = scalar_select 0, %s8, %s6
  $region1: #{actor_forward.1} parent=0
    #allocation2 [shape = 'u8[4096]{0}', space=vmem, size = 0x1000, scoped, tag = 'input window, operand 0, single buffered']
    #allocation3 [shape = 's32[1]{0}', space=sflag, size = 0x4, scoped, tag = 'scoped memory for actor_forward.1']
    #allocation4 [shape = 'u8[8192]{0}', space=vmem, size = 0x2000, scoped, tag = 'input window, operand 1, single buffered']
    #allocation5 [shape = 's32[1]{0}', space=sflag, size = 0x4, scoped, tag = 'scoped memory for actor_forward.1']
    #allocation6 [shape = 'u8[65536]{0}', space=vmem, size = 0x10000, scoped, tag = 'input window, operand 2, single buffered']
    #allocation7 [shape = 'u8[36864]{0}', space=vmem, size = 0x9000, scoped, tag = 'input window, operand 3, single buffered']
    #allocation8 [shape = 's32[1]{0}', space=sflag, size = 0x4, scoped, tag = 'scoped memory for actor_forward.1']
    #allocation9 [shape = 'u8[4096]{0}', space=vmem, size = 0x1000, scoped, tag = 'input window, operand 4, single buffered']
    %10 = vsyncpa [#allocation3], 0
    %11 = vsyncpa [#allocation5], 0
    %12 = vsyncpa [#allocation8], 0
    // Predicated region
    $region2: #{actor_forward.1} parent=1 // pred_check
      _
    $region3: #{actor_forward.1} parent=1 // pred_check_branch
      %14 = sbr.rel (0) target = $region5
    $region4: #{actor_forward.1} parent=1 // pred_region
      %16 = vsyncadd [#allocation3], 0
      %s18 = sshll.u32 %s0, 4
      %s19 = int_to_ptr.hbm [resolvable:$true] %s18
      %s20 = sshll.u32 [#allocation2], 4
      %s21 = int_to_ptr.vmem [resolvable:$true] %s20
      %23 = dma.hbm_to_vmem [thread:$0]  %s19, 128, %s21, [#allocation3]
    $region5: #{actor_forward.1} parent=1 // pred_fallthru
      _
    // Predicated region
    $region6: #{actor_forward.1} parent=1 // pred_check
      _
    $region7: #{actor_forward.1} parent=1 // pred_check_branch
      %25 = sbr.rel (0) target = $region9
    $region8: #{actor_forward.1} parent=1 // pred_region
      %27 = vsyncadd [#allocation5], 0
      %s28 = sshll.u32 %s1, 4
      %s29 = int_to_ptr.hbm [resolvable:$true] %s28
      %s30 = sshll.u32 [#allocation4], 4
      %s31 = int_to_ptr.vmem [resolvable:$true] %s30
      %36 = dma.hbm_to_vmem [thread:$0]  %s29, 256, %s31, [#allocation5], 128, 128, 8
    $region9: #{actor_forward.1} parent=1 // pred_fallthru
      _
    // Predicated region
    $region10: #{actor_forward.1} parent=1 // pred_check
      _
    $region11: #{actor_forward.1} parent=1 // pred_check_branch
      %38 = sbr.rel (0) target = $region13
    $region12: #{actor_forward.1} parent=1 // pred_region
      %40 = vsyncadd [#allocation5], 0
      %s41 = sshll.u32 %s2, 4
      %s42 = int_to_ptr.hbm [resolvable:$true] %s41
      %s43 = sshll.u32 [#allocation6], 4
      %s44 = int_to_ptr.vmem [resolvable:$true] %s43
      %49 = dma.hbm_to_vmem [thread:$0]  %s42, 2048, %s44, [#allocation5], 128, 128, 8
    $region13: #{actor_forward.1} parent=1 // pred_fallthru
      _
    // Predicated region
    $region14: #{actor_forward.1} parent=1 // pred_check
      _
    $region15: #{actor_forward.1} parent=1 // pred_check_branch
      %51 = sbr.rel (0) target = $region17
    $region16: #{actor_forward.1} parent=1 // pred_region
      %53 = vsyncadd [#allocation8], 0
      %s54 = sshll.u32 %s3, 4
      %s55 = int_to_ptr.hbm [resolvable:$true] %s54
      %s56 = sshll.u32 [#allocation7], 4
      %s57 = int_to_ptr.vmem [resolvable:$true] %s56
      %62 = dma.hbm_to_vmem [thread:$0]  %s55, 1152, %s57, [#allocation8], 128, 128, 8
    $region17: #{actor_forward.1} parent=1 // pred_fallthru
      _
    // Predicated region
    $region18: #{actor_forward.1} parent=1 // pred_check
      _
    $region19: #{actor_forward.1} parent=1 // pred_check_branch
      %64 = sbr.rel (0) target = $region21
    $region20: #{actor_forward.1} parent=1 // pred_region
      %66 = vsyncadd [#allocation8], 0
      %s68 = sshll.u32 %s4, 4
      %s69 = int_to_ptr.hbm [resolvable:$true] %s68
      %s70 = sshll.u32 [#allocation9], 4
      %s71 = int_to_ptr.vmem [resolvable:$true] %s70
      %73 = dma.hbm_to_vmem [thread:$0]  %s69, 128, %s71, [#allocation8]
    $region21: #{actor_forward.1} parent=1 // pred_fallthru
      _
    // Predicated region
    $region22: #{actor_forward.1} parent=1 // pred_check
      _
    $region23: #{actor_forward.1} parent=1 // pred_check_branch
      %75 = sbr.rel (0) target = $region25
    $region24: #{actor_forward.1} parent=1 // pred_region
      %77 = dma.done [#allocation3], 128
    $region25: #{actor_forward.1} parent=1 // pred_fallthru
      _
    // Predicated region
    $region26: #{actor_forward.1} parent=1 // pred_check
      _
    $region27: #{actor_forward.1} parent=1 // pred_check_branch
      %79 = sbr.rel (0) target = $region29
    $region28: #{actor_forward.1} parent=1 // pred_region
      %81 = dma.done [#allocation5], 256
    $region29: #{actor_forward.1} parent=1 // pred_fallthru
      _
    // Predicated region
    $region30: #{actor_forward.1} parent=1 // pred_check
      _
    $region31: #{actor_forward.1} parent=1 // pred_check_branch
      %83 = sbr.rel (0) target = $region33
    $region32: #{actor_forward.1} parent=1 // pred_region
      %85 = dma.done [#allocation5], 2048
    $region33: #{actor_forward.1} parent=1 // pred_fallthru
      _
    // Predicated region
    $region34: #{actor_forward.1} parent=1 // pred_check
      _
    $region35: #{actor_forward.1} parent=1 // pred_check_branch
      %87 = sbr.rel (0) target = $region37
    $region36: #{actor_forward.1} parent=1 // pred_region
      %89 = dma.done [#allocation8], 1152
    $region37: #{actor_forward.1} parent=1 // pred_fallthru
      _
    // Predicated region
    $region38: #{actor_forward.1} parent=1 // pred_check
      _
    $region39: #{actor_forward.1} parent=1 // pred_check_branch
      %91 = sbr.rel (0) target = $region41
    $region40: #{actor_forward.1} parent=1 // pred_region
      %93 = dma.done [#allocation8], 128
    $region41: #{actor_forward.1} parent=1 // pred_fallthru
      _
    %v94 = vld [vmem:[#allocation2] sm:$0xff]
    %v95 = vld [vmem:[#allocation9] sm:$0x1]
    %v96 = vld [vmem:[#allocation9 + $0x1] sm:$0x1]
    %v97 = vld [vmem:[#allocation9 + $0x2] sm:$0x1]
    %v98 = vld [vmem:[#allocation9 + $0x3] sm:$0x1]
    %v99 = vld [vmem:[#allocation9 + $0x4] sm:$0x1]
    %v100 = vld [vmem:[#allocation9 + $0x5] sm:$0x1]
    %v101 = vld [vmem:[#allocation9 + $0x6] sm:$0x1]
    %v102 = vld [vmem:[#allocation4] sm:$0xff]
    %v103 = vld [vmem:[#allocation4 + $0x8] sm:$0xff]
    %v104 = vperm.slane %v95, 0
    %vm105 = vcmask 130048
    %v107 = vsel %vm105, %v94, 0
    %109 = vmatpush.msra.mxu0 0.0
    %110 = vmatpush.msra.mxu0 0.0
    %111 = vmatpush.msra.mxu0 0.0
    %112 = vmatpush.msra.mxu0 0.0
    %113 = vmatpush.msra.mxu0 0.0
    %114 = vmatpush.msra.mxu0 0.0
    %115 = vmatpush.msra.mxu0 0.0
    %116 = vmatpush.msra.mxu0 0.0
    %117 = vmatpush.msra.mxu0 0.0
    %118 = vmatpush.msra.mxu0 0.0
    %119 = vmatpush.msra.mxu0 0.0
    %120 = vmatpush.msra.mxu0 0.0
    %121 = vmatpush.msra.mxu0 0.0
    %122 = vmatpush.msra.mxu0 0.0
    %123 = vmatpush.msra.mxu0 %v103
    %124 = vmatpush.msra.mxu0 %v102
    %125 = vmatmul.f32.gmra.mxu0 %v107
    %v126 = vpop.f32.mrf.mxu0
    %v127 = vadd.f32 %v104, %v126
    %128 = vdwg.mxu0
    %vm129 = vcmask 523264
    %v130 = vsel %vm129, %v127, 0.0
    %131 = vadd.xlane.f32.xlu0 %v130
    %v132 = vpop.xlane.xlu0 %131
    %v133 = vrcp.pop 64.0
    %v134 = vmul.f32 64.0, %v133
    %v135 = vsub.f32 1.0, %v134
    %v136 = vmul.f32 %v133, %v135
    %v137 = vadd.f32 %v133, %v136
    %vm138 = vweird.f32 %v133
    %v139 = vsel %vm138, %v133, %v137
    %v140 = vmul.f32 %v132, %v139
    %v141 = vsub.f32 %v127, %v140
    %v142 = vmul.f32 %v141, %v141
    %v143 = vsel %vm129, %v142, 0.0
    %144 = vadd.xlane.f32.xlu0 %v143
    %v145 = vpop.xlane.xlu0 %144
    %v146 = vmul.f32 %v145, %v139
    %v147 = vadd.f32 %v146, 1e-05
    %v148 = vrsqrt.pop %v147
    %v149 = vmul.f32 %v148, %v147
    %v150 = vmul.f32 %v149, %v148
    %v151 = vmul.f32 0.5, %v150
    %v152 = vsub.f32 1.5, %v151
    %v153 = vmul.f32 %v148, %v152
    %vm154 = vweird.f32 %v147
    %vm155 = vweird.f32 %v148
    %vm156 = vmor %vm154, %vm155
    %v157 = vsel %vm156, %v148, %v153
    %v158 = vmul.f32 %v141, %v157
    %v159 = vperm.slane %v98, 0
    %v160 = vmul.f32 %v158, %v159
    %v161 = vperm.slane %v99, 0
    %v162 = vadd.f32 %v160, %v161
    %v163 = vmax.f32 %v162, 0.0
    %v164 = vld [vmem:[#allocation6] sm:$0xff]
    %v165 = vld [vmem:[#allocation6 + $0x8] sm:$0xff]
    %v166 = vld [vmem:[#allocation6 + $0x10] sm:$0xff]
    %v167 = vld [vmem:[#allocation6 + $0x18] sm:$0xff]
    %v168 = vld [vmem:[#allocation6 + $0x20] sm:$0xff]
    %v169 = vld [vmem:[#allocation6 + $0x28] sm:$0xff]
    %v170 = vld [vmem:[#allocation6 + $0x30] sm:$0xff]
    %v171 = vld [vmem:[#allocation6 + $0x38] sm:$0xff]
    %v172 = vperm.slane %v96, 0
    %v174 = vsel %vm129, %v163, 0
    %176 = vmatpush.msra.mxu0 0.0
    %177 = vmatpush.msra.mxu0 0.0
    %178 = vmatpush.msra.mxu0 0.0
    %179 = vmatpush.msra.mxu0 0.0
    %180 = vmatpush.msra.mxu0 0.0
    %181 = vmatpush.msra.mxu0 0.0
    %182 = vmatpush.msra.mxu0 0.0
    %183 = vmatpush.msra.mxu0 0.0
    %184 = vmatpush.msra.mxu0 %v171
    %185 = vmatpush.msra.mxu0 %v170
    %186 = vmatpush.msra.mxu0 %v169
    %187 = vmatpush.msra.mxu0 %v168
    %188 = vmatpush.msra.mxu0 %v167
    %189 = vmatpush.msra.mxu0 %v166
    %190 = vmatpush.msra.mxu0 %v165
    %191 = vmatpush.msra.mxu0 %v164
    %192 = vmatmul.f32.gmra.mxu0 %v174
    %v193 = vpop.f32.mrf.mxu0
    %v194 = vadd.f32 %v172, %v193
    %195 = vdwg.mxu0
    %v196 = vsel %vm129, %v194, 0.0
    %197 = vadd.xlane.f32.xlu0 %v196
    %v198 = vpop.xlane.xlu0 %197
    %v199 = vmul.f32 %v198, %v139
    %v200 = vsub.f32 %v194, %v199
    %v201 = vmul.f32 %v200, %v200
    %v202 = vsel %vm129, %v201, 0.0
    %203 = vadd.xlane.f32.xlu0 %v202
    %v204 = vpop.xlane.xlu0 %203
    %v205 = vmul.f32 %v204, %v139
    %v206 = vadd.f32 %v205, 1e-05
    %v207 = vrsqrt.pop %v206
    %v208 = vmul.f32 %v207, %v206
    %v209 = vmul.f32 %v208, %v207
    %v210 = vmul.f32 0.5, %v209
    %v211 = vsub.f32 1.5, %v210
    %v212 = vmul.f32 %v207, %v211
    %vm213 = vweird.f32 %v206
    %vm214 = vweird.f32 %v207
    %vm215 = vmor %vm213, %vm214
    %v216 = vsel %vm215, %v207, %v212
    %v217 = vmul.f32 %v200, %v216
    %v218 = vperm.slane %v100, 0
    %v219 = vmul.f32 %v217, %v218
    %v220 = vperm.slane %v101, 0
    %v221 = vadd.f32 %v219, %v220
    %v222 = vmax.f32 %v221, 0.0
    %s223 = scalar_lea.vmem [#allocation6], 64
    %v224 = vld [vmem:[%s223] sm:$0xff]
    %v225 = vld [vmem:[%s223 + $0x8] sm:$0xff]
    %v226 = vld [vmem:[%s223 + $0x10] sm:$0xff]
    %v227 = vld [vmem:[%s223 + $0x18] sm:$0xff]
    %v228 = vld [vmem:[%s223 + $0x20] sm:$0xff]
    %v229 = vld [vmem:[%s223 + $0x28] sm:$0xff]
    %v230 = vld [vmem:[%s223 + $0x30] sm:$0xff]
    %v231 = vld [vmem:[%s223 + $0x38] sm:$0xff]
    %v232 = vperm.slane %v97, 0
    %v234 = vsel %vm129, %v222, 0
    %236 = vmatpush.msra.mxu0 0.0
    %237 = vmatpush.msra.mxu0 0.0
    %238 = vmatpush.msra.mxu0 0.0
    %239 = vmatpush.msra.mxu0 0.0
    %240 = vmatpush.msra.mxu0 0.0
    %241 = vmatpush.msra.mxu0 0.0
    %242 = vmatpush.msra.mxu0 0.0
    %243 = vmatpush.msra.mxu0 0.0
    %244 = vmatpush.msra.mxu0 %v231
    %245 = vmatpush.msra.mxu0 %v230
    %246 = vmatpush.msra.mxu0 %v229
    %247 = vmatpush.msra.mxu0 %v228
    %248 = vmatpush.msra.mxu0 %v227
    %249 = vmatpush.msra.mxu0 %v226
    %250 = vmatpush.msra.mxu0 %v225
    %251 = vmatpush.msra.mxu0 %v224
    %252 = vmatmul.f32.gmra.mxu0 %v234
    %v253 = vpop.f32.mrf.mxu0
    %v254 = vadd.f32 %v232, %v253
    %255 = vdwg.mxu0
    %v256 = vmax.f32 %v254, 0.0
    %v257 = vld [vmem:[#allocation7] sm:$0xff]
    %v258 = vld [vmem:[#allocation7 + $0x8] sm:$0xff]
    %v259 = vld [vmem:[#allocation7 + $0x10] sm:$0xff]
    %v260 = vld [vmem:[#allocation7 + $0x18] sm:$0xff]
    %v261 = vld [vmem:[#allocation7 + $0x20] sm:$0xff]
    %v262 = vld [vmem:[#allocation7 + $0x28] sm:$0xff]
    %v263 = vld [vmem:[#allocation7 + $0x30] sm:$0xff]
    %v264 = vld [vmem:[#allocation7 + $0x38] sm:$0xff]
    %v265 = vld [vmem:[#allocation7 + $0x40] sm:$0x1]
    %v266 = vperm.slane %v265, 0
    %v268 = vsel %vm129, %v256, 0
    %270 = vmatpush.msra.mxu0 0.0
    %271 = vmatpush.msra.mxu0 0.0
    %272 = vmatpush.msra.mxu0 0.0
    %273 = vmatpush.msra.mxu0 0.0
    %274 = vmatpush.msra.mxu0 0.0
    %275 = vmatpush.msra.mxu0 0.0
    %276 = vmatpush.msra.mxu0 0.0
    %277 = vmatpush.msra.mxu0 0.0
    %278 = vmatpush.msra.mxu0 %v264
    %279 = vmatpush.msra.mxu0 %v263
    %280 = vmatpush.msra.mxu0 %v262
    %281 = vmatpush.msra.mxu0 %v261
    %282 = vmatpush.msra.mxu0 %v260
    %283 = vmatpush.msra.mxu0 %v259
    %284 = vmatpush.msra.mxu0 %v258
    %285 = vmatpush.msra.mxu0 %v257
    %286 = vmatmul.f32.gmra.mxu0 %v268
    %v287 = vpop.f32.mrf.mxu0
    %v288 = vadd.f32 %v266, %v287
    %289 = vdwg.mxu0
    %v290 = vlaneseq
    %v291 = vand.u32 %v290, 127
    %vm292 = vcmp.lt.s32.totalorder %v291, 4
    %v293 = vsub.f32 0.0, %v288
    %v294 = vmax.f32 %v288, -20.0
    %v295 = vmin.f32 %v294, 20.0
    %v296 = vsel %vm292, %v293, %v295
    %v297 = vmul.f32 %v296, 1.442695
    %v298 = vpow.pop %v297
    %v299 = vadd.f32 %v298, 1.0
    %v300 = vrcp.pop %v299
    %v301 = vsel %vm292, %v300, %v298
    %302 = vst [vmem:[%s5] sm:$0xff] %v301
    // Predicated region
    $region42: #{actor_forward.1} parent=1 // pred_check
      _
    $region43: #{actor_forward.1} parent=1 // pred_check_branch
      %304 = sbr.rel (0) target = $region45
    $region44: #{actor_forward.1} parent=1 // pred_region
      _
    $region45: #{actor_forward.1} parent=1 // pred_fallthru
      _
    // Predicated region
    $region46: #{actor_forward.1} parent=1 // pred_check
      _
    $region47: #{actor_forward.1} parent=1 // pred_check_branch
      %306 = sbr.rel (0) target = $region49
    $region48: #{actor_forward.1} parent=1 // pred_region
      _
    $region49: #{actor_forward.1} parent=1 // pred_fallthru
      _
    %307 = vsyncpa [#allocation3], 1
    %308 = vsyncpa [#allocation5], 1
    %309 = vsyncpa [#allocation8], 1

</llo_original>
